<compile_context>
chip_gen: v5e
topology: v5e:2x2
jax: 0.10.0
libtpu: 0.0.40
codegen_flags: <defaults>
</compile_context>

<pallas_src>
import jax
import jax.numpy as jnp
from jax.experimental import pallas as pl
from jax.experimental.pallas import tpu as pltpu


# MLP dimensions.
_D_IN, _D_H, _D_OUT = 6, 32, 3

# Padded / transposed-layout dimensions.
_IN_PAD = 8          # 6 features + ones row (bias fold) + 1 zero row
_ONE_IN = 6          # sublane of xt holding the constant 1.0
_H_PAD = 40          # 32 hidden + ones row (bias fold) + 7 zero rows
_ONE_H = 32          # sublane of h1/h2 holding the constant 1.0
_OUT_PAD = 8         # 3 outputs padded to one sublane group

# Packed-parameter block layout (rows are sublane-aligned).
_W1_R, _W2_R, _W3_R = 0, _H_PAD, 2 * _H_PAD
_P_ROWS, _P_COLS = 2 * _H_PAD + _OUT_PAD, _H_PAD          # (88, 40)


def _round_up(n, m):
    return ((n + m - 1) // m) * m


def _mlp_kernel(xt_ref, p_ref, ot_ref):
    # One fused invocation per batch tile: 3 MXU matmuls + 2 VPU ReLUs.
    xt = xt_ref[...]                                        # (8, tile_b)

    # Static slices out of the single packed parameter block.
    w1 = p_ref[_W1_R:_W1_R + _H_PAD, 0:_IN_PAD]             # (40, 8)  [W1 | b1 | 1-prop]
    w2 = p_ref[_W2_R:_W2_R + _H_PAD, :]                     # (40, 40) [W2 | b2 | 1-prop]
    w3 = p_ref[_W3_R:_W3_R + _OUT_PAD, :]                   # (8, 40)  [W3 | b3]

    # Biases are folded into the dots via the constant-1 row of xt/h1/h2.
    h1 = jnp.maximum(jnp.dot(w1, xt, preferred_element_type=jnp.float32), 0.0)
    h2 = jnp.maximum(jnp.dot(w2, h1, preferred_element_type=jnp.float32), 0.0)
    y = jnp.dot(w3, h2, preferred_element_type=jnp.float32)
    ot_ref[...] = y.astype(ot_ref.dtype)                    # (8, tile_b), lane-dense


def pack_params(w1, b1, w2, b2, w3, b3, dtype=jnp.float32):
    """Pack all layers into one (88, 40) block, biases folded into the weights.

    Weights use PyTorch convention: w* is [out_features, in_features],
    b* is [out_features].

    Row layout:
      rows  0..39: W1 block (cols 0..5 = W1, col 6 = b1, row 32/col 6 = 1.0)
      rows 40..79: W2 block (cols 0..31 = W2, col 32 = b2, row 32/col 32 = 1.0)
      rows 80..87: W3 block (cols 0..31 = W3, col 32 = b3)
    The "1.0" entries propagate the constant-1 row through each layer so the
    next layer's bias fold keeps working; ReLU(1) == 1 so it survives.
    """
    p = jnp.zeros((_P_ROWS, _P_COLS), jnp.float32)
    # Layer 1.
    p = p.at[_W1_R:_W1_R + _D_H, 0:_D_IN].set(w1)
    p = p.at[_W1_R:_W1_R + _D_H, _ONE_IN].set(jnp.reshape(b1, (-1,)))
    p = p.at[_W1_R + _ONE_H, _ONE_IN].set(1.0)
    # Layer 2.
    p = p.at[_W2_R:_W2_R + _D_H, 0:_D_H].set(w2)
    p = p.at[_W2_R:_W2_R + _D_H, _ONE_H].set(jnp.reshape(b2, (-1,)))
    p = p.at[_W2_R + _ONE_H, _ONE_H].set(1.0)
    # Layer 3.
    p = p.at[_W3_R:_W3_R + _D_OUT, 0:_D_H].set(w3)
    p = p.at[_W3_R:_W3_R + _D_OUT, _ONE_H].set(jnp.reshape(b3, (-1,)))
    return p.astype(dtype)


def _default_tile_b(batch):
    b128 = _round_up(max(batch, 1), 128)
    max_tile = 8192   # VMEM-safe on all generations (v5e 16 MiB scoped default).
    min_tiles = 1 if b128 <= 128 else 2   # >=2 tiles so v7x megacore splits work.
    n_tiles = max(min_tiles, -(-b128 // max_tile))
    return _round_up(-(-b128 // n_tiles), 128)


def quadrotor_mlp(x, packed_params, *, tile_b=None):
    """x: [B, 6] float32 -> [B, 3] float32. packed_params: (96->88, 40) block."""
    B = x.shape[0]
    assert x.shape[1] == _D_IN

    if tile_b is None:
        tile_b = _default_tile_b(B)
    tile_b = _round_up(max(tile_b, 128), 128)
    b_pad = _round_up(max(B, 1), tile_b)

    # Build the transposed, feature-padded input: batch on lanes.
    xt = jnp.zeros((_IN_PAD, b_pad), jnp.float32)
    xt = xt.at[0:_D_IN, 0:B].set(x.T.astype(jnp.float32))
    xt = xt.at[_ONE_IN, 0:B].set(1.0)            # bias-fold row (padded cols stay 0)
    xt = xt.astype(packed_params.dtype)

    grid = (b_pad // tile_b,)
    out_t = pl.pallas_call(
        _mlp_kernel,
        out_shape=jax.ShapeDtypeStruct((_OUT_PAD, b_pad), jnp.float32),
        grid=grid,
        in_specs=[
            # Streamed batch tiles (lanes = batch), double-buffered by Pallas.
            pl.BlockSpec((_IN_PAD, tile_b), lambda i: (0, i)),
            # Single packed parameter block, constant index -> VMEM-resident.
            pl.BlockSpec((_P_ROWS, _P_COLS), lambda i: (0, 0)),
        ],
        out_specs=pl.BlockSpec((_OUT_PAD, tile_b), lambda i: (0, i)),
        compiler_params=pltpu.CompilerParams(
            dimension_semantics=("parallel",)),
    )(xt, packed_params)

    # Back to row-major [B, 3] in the XLA wrapper.
    return out_t[:_D_OUT, :B].T


def init_params(key):
    """Deterministic init mimicking PyTorch nn.Linear (uniform +-1/sqrt(fan_in)).

    Weights in PyTorch convention: [out_features, in_features]; biases [out].
    """
    # TODO(synk): the original module loads weights from 'model.pt'; replaced
    # with deterministic in-script initialization.
    dims = [(_D_H, _D_IN), (_D_H, _D_H), (_D_OUT, _D_H)]
    params = []
    for fan_out, fan_in in dims:
        key, kw, kb = jax.random.split(key, 3)
        bound = 1.0 / jnp.sqrt(jnp.float32(fan_in))
        w = jax.random.uniform(kw, (fan_out, fan_in), jnp.float32, -bound, bound)
        b = jax.random.uniform(kb, (fan_out,), jnp.float32, -bound, bound)
        params.extend([w, b])
    return tuple(params)


def reference_mlp(x, params):
    w1, b1, w2, b2, w3, b3 = params
    h1 = jnp.maximum(x @ w1.T + b1, 0.0)
    h2 = jnp.maximum(h1 @ w2.T + b2, 0.0)
    return h2 @ w3.T + b3


if __name__ == "__main__":
    key = jax.random.PRNGKey(0)
    key, kx = jax.random.split(key)
    # Quadrotor state vector has 6 features; small batch of 8 states.
    x = jax.random.normal(kx, (8, 6), dtype=jnp.float32)
    raw_params = init_params(key)
    packed = pack_params(*raw_params)

    # --- single tile (exact vs reference) ---
    out = jax.block_until_ready(quadrotor_mlp(x, packed))
    ref = reference_mlp(x, raw_params)
    assert out.shape == (8, 3)
    assert jnp.allclose(out, ref, atol=1e-4, rtol=1e-4)

    # --- multi-tile grid with a ragged batch ---
    key, kx2 = jax.random.split(key)
    x2 = jax.random.normal(kx2, (300, 6), dtype=jnp.float32)
    out2 = jax.block_until_ready(quadrotor_mlp(x2, packed, tile_b=128))
    ref2 = reference_mlp(x2, raw_params)
    assert out2.shape == (300, 3)
    assert jnp.allclose(out2, ref2, atol=1e-4, rtol=1e-4)

    print("KERNEL_OK")
</pallas_src>

<mosaic_0001>
module attributes {stable_mosaic.version = 11 : i64} {
  func.func @_mlp_kernel(%arg0: i32, %arg1: memref<8x128xf32, #tpu.memory_space<vmem>>, %arg2: memref<88x40xf32, #tpu.memory_space<vmem>>, %arg3: memref<8x128xf32, #tpu.memory_space<vmem>>) attributes {dimension_semantics = [#tpu.dimension_semantics<parallel>], iteration_bounds = array<i64: 1>, scalar_prefetch = 0 : i64, scratch_operands = 0 : i64, tpu.core_type = #tpu.core_type<tc>, window_params = [{transform_indices = @transform_0, window_bounds = array<i64: 8, 128>}, {pipeline_mode = #tpu.pipeline_mode<synchronous>, transform_indices = @transform_1, window_bounds = array<i64: 88, 40>}, {transform_indices = @transform_2, window_bounds = array<i64: 8, 128>}]} {
    %c0 = arith.constant 0 : index
    %c0_0 = arith.constant 0 : index
    %0 = vector.load %arg1[%c0, %c0_0] : memref<8x128xf32, #tpu.memory_space<vmem>>, vector<8x128xf32>
    %c0_1 = arith.constant 0 : index
    %c0_2 = arith.constant 0 : index
    %1 = vector.load %arg2[%c0_1, %c0_2] : memref<88x40xf32, #tpu.memory_space<vmem>>, vector<40x8xf32>
    %c40 = arith.constant 40 : index
    %c0_3 = arith.constant 0 : index
    %2 = vector.load %arg2[%c40, %c0_3] : memref<88x40xf32, #tpu.memory_space<vmem>>, vector<40x40xf32>
    %c80 = arith.constant 80 : index
    %c0_4 = arith.constant 0 : index
    %3 = vector.load %arg2[%c80, %c0_4] : memref<88x40xf32, #tpu.memory_space<vmem>>, vector<8x40xf32>
    %cst = arith.constant dense<0.000000e+00> : vector<40x128xf32>
    %4 = tpu.matmul %1, %0, %cst {dimension_numbers = #tpu.dot_dimension_numbers<[1], [0], [0], [1], [0, 0, 1, 1], [], []>} : vector<40x8xf32>, vector<8x128xf32>, vector<40x128xf32> -> vector<40x128xf32>
    %cst_5 = arith.constant 0.000000e+00 : f32
    %5 = vector.broadcast %cst_5 : f32 to vector<40x128xf32>
    %6 = arith.maximumf %4, %5 : vector<40x128xf32>
    %cst_6 = arith.constant dense<0.000000e+00> : vector<40x128xf32>
    %7 = tpu.matmul %2, %6, %cst_6 {dimension_numbers = #tpu.dot_dimension_numbers<[1], [0], [0], [1], [0, 0, 1, 1], [], []>} : vector<40x40xf32>, vector<40x128xf32>, vector<40x128xf32> -> vector<40x128xf32>
    %cst_7 = arith.constant 0.000000e+00 : f32
    %8 = vector.broadcast %cst_7 : f32 to vector<40x128xf32>
    %9 = arith.maximumf %7, %8 : vector<40x128xf32>
    %cst_8 = arith.constant dense<0.000000e+00> : vector<8x128xf32>
    %10 = tpu.matmul %3, %9, %cst_8 {dimension_numbers = #tpu.dot_dimension_numbers<[1], [0], [0], [1], [0, 0, 1, 1], [], []>} : vector<8x40xf32>, vector<40x128xf32>, vector<8x128xf32> -> vector<8x128xf32>
    %c0_9 = arith.constant 0 : index
    %c0_10 = arith.constant 0 : index
    %11 = vector.load %arg3[%c0_9, %c0_10] : memref<8x128xf32, #tpu.memory_space<vmem>>, vector<8x128xf32>
    tpu.vector_store %arg3[%c0_9, %c0_10], %10 {strides = array<i32>} : memref<8x128xf32, #tpu.memory_space<vmem>>, vector<8x128xf32>,
    return
  }
  func.func @transform_0(%arg0: i32) -> (i32, i32) {
    %c0_i32 = arith.constant 0 : i32
    %c0_i32_0 = arith.constant 0 : i32
    return %c0_i32, %arg0 : i32, i32
  }
  func.func @transform_1(%arg0: i32) -> (i32, i32) {
    %c0_i32 = arith.constant 0 : i32
    %c0_i32_0 = arith.constant 0 : i32
    %c0_i32_1 = arith.constant 0 : i32
    return %c0_i32, %c0_i32_0 : i32, i32
  }
  func.func @transform_2(%arg0: i32) -> (i32, i32) {
    %c0_i32 = arith.constant 0 : i32
    %c0_i32_0 = arith.constant 0 : i32
    return %c0_i32, %arg0 : i32, i32
  }
}

</mosaic_0001>

<llo_original>
// kernel: tpu_custom_call.1
$region0: #{tpu_custom_call.1}
  #allocation0 [shape = 'u32[]', space=smem, size = 0x4, offset = 0x4, fixed_abs, tag = 'smem constant byte address 0x4 - core index']
  #allocation1 [shape = 'u32[72,128]{1,0:T(1,128)}', space=vmem, size = 0x9000, scoped, tag = 'internal scratch']
  %s0 = inlined_call_operand.vmem [shape: f32[8,128], index: 0, kind: input, shape index: {}]
  %s1 = inlined_call_operand.vmem [shape: f32[88,40], index: 1, kind: input, shape index: {}]
  %s2 = inlined_call_operand.hbm [shape: f32[8,128], index: 2, kind: output, shape index: {}]
  %s3 = sld [smem:[#allocation0]]
  $region18: #{tpu_custom_call.1} parent=0
    _
  %s5 = ssub.s32 1, %s3
  %s6 = scalar_select 0, %s5, %s3
  $region1: #{tpu_custom_call.1} parent=0
    #allocation2 [shape = 'u8[4096]{0}', space=vmem, size = 0x1000, scoped, tag = 'output window, operand 0, single buffered']
    #allocation3 [shape = 's32[1]{0}', space=sflag, size = 0x4, scoped, tag = 'scoped memory for tpu_custom_call.1']
    %7 = vsyncpa [#allocation3], 0
    // Predicated region
    $region2: #{tpu_custom_call.1} parent=1 // pred_check
      _
    $region3: #{tpu_custom_call.1} parent=1 // pred_check_branch
      %9 = sbr.rel (0) target = $region5
    $region4: #{tpu_custom_call.1} parent=1 // pred_region
      _
    $region5: #{tpu_custom_call.1} parent=1 // pred_fallthru
      _
    // Predicated region
    $region6: #{tpu_custom_call.1} parent=1 // pred_check
      _
    $region7: #{tpu_custom_call.1} parent=1 // pred_check_branch
      %11 = sbr.rel (0) target = $region9
    $region8: #{tpu_custom_call.1} parent=1 // pred_region
      _
    $region9: #{tpu_custom_call.1} parent=1 // pred_fallthru
      _
    %v12 = vld [vmem:[%s0] sm:$0xff]
    %v13 = vld [vmem:[%s1] sm:$0xff]
    %v14 = vld [vmem:[%s1 + $0x8] sm:$0xff]
    %v15 = vld [vmem:[%s1 + $0x10] sm:$0xff]
    %v16 = vld [vmem:[%s1 + $0x18] sm:$0xff]
    %v17 = vld [vmem:[%s1 + $0x20] sm:$0xff]
    %v18 = vld [vmem:[%s1 + $0x28] sm:$0xff]
    %v19 = vld [vmem:[%s1 + $0x30] sm:$0xff]
    %v20 = vld [vmem:[%s1 + $0x38] sm:$0xff]
    %v21 = vld [vmem:[%s1 + $0x40] sm:$0xff]
    %v22 = vld [vmem:[%s1 + $0x48] sm:$0xff]
    %v23 = vld [vmem:[%s1 + $0x50] sm:$0xff]
    %vm24 = vcmask 64512
    %v26 = vsel %vm24, %v13, 0
    %v29 = vsel %vm24, %v14, 0
    %v32 = vsel %vm24, %v15, 0
    %v35 = vsel %vm24, %v16, 0
    %v38 = vsel %vm24, %v17, 0
    %40 = vmatpush.msra.mxu0 0.0
    %41 = vmatpush.msra.mxu0 0.0
    %42 = vmatpush.msra.mxu0 0.0
    %43 = vmatpush.msra.mxu0 0.0
    %44 = vmatpush.msra.mxu0 0.0
    %45 = vmatpush.msra.mxu0 0.0
    %46 = vmatpush.msra.mxu0 0.0
    %47 = vmatpush.msra.mxu0 0.0
    %48 = vmatpush.msra.mxu0 0.0
    %49 = vmatpush.msra.mxu0 0.0
    %50 = vmatpush.msra.mxu0 0.0
    %51 = vmatpush.msra.mxu0 0.0
    %52 = vmatpush.msra.mxu0 0.0
    %53 = vmatpush.msra.mxu0 0.0
    %54 = vmatpush.msra.mxu0 0.0
    %55 = vmatpush.msra.mxu0 %v12
    %56 = vmatmul.f32.gmra.mxu0 %v26
    %v57 = vpop.f32.mrf.mxu0
    %v58 = vadd.f32 0.0, %v57
    %59 = vmatmul.f32.gmra.mxu0 %v29
    %v60 = vpop.f32.mrf.mxu0
    %v61 = vadd.f32 0.0, %v60
    %62 = vmatmul.f32.gmra.mxu0 %v32
    %v63 = vpop.f32.mrf.mxu0
    %v64 = vadd.f32 0.0, %v63
    %65 = vmatmul.f32.gmra.mxu0 %v35
    %v66 = vpop.f32.mrf.mxu0
    %v67 = vadd.f32 0.0, %v66
    %68 = vmatmul.f32.gmra.mxu0 %v38
    %v69 = vpop.f32.mrf.mxu0
    %v70 = vadd.f32 0.0, %v69
    %71 = vdwg.mxu0
    %v72 = vmax.f32 %v58, 0.0
    %v73 = vmax.f32 %v61, 0.0
    %v74 = vmax.f32 %v64, 0.0
    %v75 = vmax.f32 %v67, 0.0
    %v76 = vmax.f32 %v70, 0.0
    %vm77 = vcmask 326656
    %v79 = vsel %vm77, %v18, 0
    %v82 = vsel %vm77, %v19, 0
    %v85 = vsel %vm77, %v20, 0
    %v88 = vsel %vm77, %v21, 0
    %v91 = vsel %vm77, %v22, 0
    %93 = vmatpush.msra.mxu0 0.0
    %94 = vmatpush.msra.mxu0 0.0
    %95 = vmatpush.msra.mxu0 0.0
    %96 = vmatpush.msra.mxu0 0.0
    %97 = vmatpush.msra.mxu0 0.0
    %98 = vmatpush.msra.mxu0 0.0
    %99 = vmatpush.msra.mxu0 0.0
    %100 = vmatpush.msra.mxu0 0.0
    %101 = vmatpush.msra.mxu0 0.0
    %102 = vmatpush.msra.mxu0 0.0
    %103 = vmatpush.msra.mxu0 0.0
    %104 = vmatpush.msra.mxu0 %v76
    %105 = vmatpush.msra.mxu0 %v75
    %106 = vmatpush.msra.mxu0 %v74
    %107 = vmatpush.msra.mxu0 %v73
    %108 = vmatpush.msra.mxu0 %v72
    %109 = vmatmul.f32.gmra.mxu0 %v79
    %v110 = vpop.f32.mrf.mxu0
    %v111 = vadd.f32 0.0, %v110
    %112 = vmatmul.f32.gmra.mxu0 %v82
    %v113 = vpop.f32.mrf.mxu0
    %v114 = vadd.f32 0.0, %v113
    %115 = vmatmul.f32.gmra.mxu0 %v85
    %v116 = vpop.f32.mrf.mxu0
    %v117 = vadd.f32 0.0, %v116
    %118 = vmatmul.f32.gmra.mxu0 %v88
    %v119 = vpop.f32.mrf.mxu0
    %v120 = vadd.f32 0.0, %v119
    %121 = vmatmul.f32.gmra.mxu0 %v91
    %v122 = vpop.f32.mrf.mxu0
    %v123 = vadd.f32 0.0, %v122
    %124 = vdwg.mxu0
    %v125 = vmax.f32 %v111, 0.0
    %v126 = vmax.f32 %v114, 0.0
    %v127 = vmax.f32 %v117, 0.0
    %v128 = vmax.f32 %v120, 0.0
    %v129 = vmax.f32 %v123, 0.0
    %v131 = vsel %vm77, %v23, 0
    %133 = vmatpush.msra.mxu0 0.0
    %134 = vmatpush.msra.mxu0 0.0
    %135 = vmatpush.msra.mxu0 0.0
    %136 = vmatpush.msra.mxu0 0.0
    %137 = vmatpush.msra.mxu0 0.0
    %138 = vmatpush.msra.mxu0 0.0
    %139 = vmatpush.msra.mxu0 0.0
    %140 = vmatpush.msra.mxu0 0.0
    %141 = vmatpush.msra.mxu0 0.0
    %142 = vmatpush.msra.mxu0 0.0
    %143 = vmatpush.msra.mxu0 0.0
    %144 = vmatpush.msra.mxu0 %v129
    %145 = vmatpush.msra.mxu0 %v128
    %146 = vmatpush.msra.mxu0 %v127
    %147 = vmatpush.msra.mxu0 %v126
    %148 = vmatpush.msra.mxu0 %v125
    %149 = vmatmul.f32.gmra.mxu0 %v131
    %v150 = vpop.f32.mrf.mxu0
    %v151 = vadd.f32 0.0, %v150
    %152 = vdwg.mxu0
    %153 = vst [vmem:[#allocation2] sm:$0xff] %v151
    // Predicated region
    $region10: #{tpu_custom_call.1} parent=1 // pred_check
      _
    $region11: #{tpu_custom_call.1} parent=1 // pred_check_branch
      %155 = sbr.rel (0) target = $region13
    $region12: #{tpu_custom_call.1} parent=1 // pred_region
      %157 = vsyncadd [#allocation3], 0
      %s159 = sshll.u32 [#allocation2], 4
      %s160 = int_to_ptr.vmem [resolvable:$true] %s159
      %s161 = sshll.u32 %s2, 4
      %s162 = int_to_ptr.hbm [resolvable:$true] %s161
      %164 = dma.vmem_to_hbm [thread:$0]  %s160, 128, %s162, [#allocation3]
    $region13: #{tpu_custom_call.1} parent=1 // pred_fallthru
      _
    // Predicated region
    $region14: #{tpu_custom_call.1} parent=1 // pred_check
      _
    $region15: #{tpu_custom_call.1} parent=1 // pred_check_branch
      %166 = sbr.rel (0) target = $region17
    $region16: #{tpu_custom_call.1} parent=1 // pred_region
      %168 = dma.done [#allocation3], 128
    $region17: #{tpu_custom_call.1} parent=1 // pred_fallthru
      _
    %169 = vsyncpa [#allocation3], 1

</llo_original>
